<compile_context>
chip_gen: v7x
topology: tpu7x:2x2x1
jax: 0.10.0
libtpu: 0.0.40
codegen_flags: <defaults>
</compile_context>

<pallas_src>
import math
from functools import partial

import jax
import jax.numpy as jnp
from jax import lax
from jax.experimental import pallas as pl
from jax.experimental.pallas import tpu as pltpu


# ----------------------------- kernels -----------------------------

def _linear_kernel(x_ref, w_ref, b_ref, o_ref, acc_ref):
    """Eval / p==0 path: out = x @ W^T + b (no noise, no target)."""
    k = pl.program_id(2)

    @pl.when(k == 0)
    def _():
        acc_ref[...] = jnp.zeros_like(acc_ref)

    acc_ref[...] += lax.dot_general(
        x_ref[...], w_ref[...],
        dimension_numbers=(((1,), (1,)), ((), ())),
        preferred_element_type=jnp.float32)

    @pl.when(k == pl.num_programs(2) - 1)
    def _():
        o_ref[...] = (acc_ref[...] + b_ref[...]).astype(o_ref.dtype)


def _mix_x_kernel(x_ref, w_ref, noise_ref, b_ref, o_ref, acc_ref, *, inv_keep):
    """target is None: mixout(W, 0, p) = noise * W / (1-p). Noise is per input
    column, so it commutes through the matmul:
        out = (x * noise * (1/(1-p))) @ W^T + b
    -> B*K elementwise work instead of N*K, zero target DMA."""
    k = pl.program_id(2)

    @pl.when(k == 0)
    def _():
        acc_ref[...] = jnp.zeros_like(acc_ref)

    scale = (noise_ref[...] * inv_keep).astype(x_ref.dtype)   # (1, tk)
    x_scaled = x_ref[...] * scale                             # (tm, tk)
    acc_ref[...] += lax.dot_general(
        x_scaled, w_ref[...],
        dimension_numbers=(((1,), (1,)), ((), ())),
        preferred_element_type=jnp.float32)

    @pl.when(k == pl.num_programs(2) - 1)
    def _():
        o_ref[...] = (acc_ref[...] + b_ref[...]).astype(o_ref.dtype)


def _mix_w_kernel(x_ref, w_ref, t_ref, noise_ref, b_ref, o_ref, acc_ref, *, p, inv_keep):
    """General target: W_mix = (noise*W + (1-p-noise)*T) * (1/(1-p)) on the
    current (tn, tk) tile; contraction on the last axis (no transpose)."""
    k = pl.program_id(2)

    @pl.when(k == 0)
    def _():
        acc_ref[...] = jnp.zeros_like(acc_ref)

    noise = noise_ref[...]                                     # (1, tk)
    w_mixed = (noise * w_ref[...] + (1.0 - p - noise) * t_ref[...]) * inv_keep
    acc_ref[...] += lax.dot_general(
        x_ref[...], w_mixed.astype(w_ref.dtype),
        dimension_numbers=(((1,), (1,)), ((), ())),
        preferred_element_type=jnp.float32)

    @pl.when(k == pl.num_programs(2) - 1)
    def _():
        o_ref[...] = (acc_ref[...] + b_ref[...]).astype(o_ref.dtype)


# ----------------------------- wrapper -----------------------------

def _round_up(v, m):
    return ((v + m - 1) // m) * m


def _pad2(a, m0, m1):
    r0 = _round_up(a.shape[0], m0) - a.shape[0]
    r1 = _round_up(a.shape[1], m1) - a.shape[1]
    if r0 or r1:
        a = jnp.pad(a, ((0, r0), (0, r1)))
    return a


def mix_linear(x, weight, bias=None, target=None, noise=None, *,
               p=0.0, training=False, tm=256, tn=256, tk=512):
    """Forward pass of MixLinear.

    x:      (B, in_features)
    weight: (out_features, in_features)
    bias:   (out_features,) or None
    target: (out_features, in_features) or None
    noise:  (in_features,) or (1, in_features) Bernoulli(1-p) mask (float).
    Tile defaults (256, 256, 512) keep double-buffered live VMEM ~3.5 MiB in f32,
    safe for v5e/v6e and the smaller 64 MiB VMEM on v7x.
    """
    assert tm % 8 == 0 and tn % 128 == 0 and tk % 128 == 0
    B, K = x.shape
    N, K2 = weight.shape
    assert K == K2, "in_features mismatch"

    if bias is None:
        bias = jnp.zeros((N,), weight.dtype)

    p = float(p)
    eval_mode = (p == 0.0) or (not training)

    # p == 1: mixed weight is exactly `target` (zeros if target is None).
    if (not eval_mode) and p == 1.0:
        weight = target if target is not None else jnp.zeros_like(weight)
        target = None
        eval_mode = True

    if not eval_mode and noise is None:
        raise ValueError("noise mask required when training with p > 0")

    # effective tile sizes, shrunk for small problems but kept (8,128)-aligned
    tm_eff = min(tm, _round_up(B, 8))
    tn_eff = min(tn, _round_up(N, 128))
    tk_eff = min(tk, _round_up(K, 128))

    Bp = _round_up(B, tm_eff)
    Np = _round_up(N, tn_eff)
    Kp = _round_up(K, tk_eff)

    x_p = _pad2(x, tm_eff, tk_eff)
    w_p = _pad2(weight, tn_eff, tk_eff)
    b_p = _pad2(bias.reshape(1, N), 1, tn_eff)

    grid = (Bp // tm_eff, Np // tn_eff, Kp // tk_eff)

    x_spec = pl.BlockSpec((tm_eff, tk_eff), lambda i, j, k: (i, k))
    w_spec = pl.BlockSpec((tn_eff, tk_eff), lambda i, j, k: (j, k))
    n_spec = pl.BlockSpec((1, tk_eff), lambda i, j, k: (0, k))
    b_spec = pl.BlockSpec((1, tn_eff), lambda i, j, k: (0, j))
    o_spec = pl.BlockSpec((tm_eff, tn_eff), lambda i, j, k: (i, j))

    if eval_mode:
        kernel = _linear_kernel
        args = (x_p, w_p, b_p)
        in_specs = [x_spec, w_spec, b_spec]
    else:
        noise2d = noise.reshape(1, K).astype(jnp.float32)
        noise_p = _pad2(noise2d, 1, tk_eff)
        inv_keep = 1.0 / (1.0 - p)
        if target is None:
            kernel = partial(_mix_x_kernel, inv_keep=inv_keep)
            args = (x_p, w_p, noise_p, b_p)
            in_specs = [x_spec, w_spec, n_spec, b_spec]
        else:
            t_p = _pad2(target, tn_eff, tk_eff)
            kernel = partial(_mix_w_kernel, p=p, inv_keep=inv_keep)
            args = (x_p, w_p, t_p, noise_p, b_p)
            in_specs = [x_spec, w_spec, w_spec, n_spec, b_spec]

    out_bytes = Bp * Np * jnp.dtype(x.dtype).itemsize
    bytes_accessed = int(sum(int(a.size) * a.dtype.itemsize for a in args)) + out_bytes
    cost = pl.CostEstimate(flops=2 * Bp * Np * Kp, transcendentals=0,
                           bytes_accessed=bytes_accessed)

    out = pl.pallas_call(
        kernel,
        out_shape=jax.ShapeDtypeStruct((Bp, Np), x.dtype),
        grid=grid,
        in_specs=in_specs,
        out_specs=o_spec,
        scratch_shapes=[pltpu.VMEM((tm_eff, tn_eff), jnp.float32)],
        compiler_params=pltpu.CompilerParams(
            dimension_semantics=("parallel", "parallel", "arbitrary")),
        cost_estimate=cost,
    )(*args)

    return out[:B, :N]


def init_mixlinear_params(key, in_features, out_features):
    """Deterministic init matching nn.Linear / MixLinear.reset_parameters."""
    kw, kb = jax.random.split(key)
    bound = 1.0 / math.sqrt(in_features)   # kaiming_uniform_(a=sqrt(5)) on (N, K)
    weight = jax.random.uniform(kw, (out_features, in_features), jnp.float32, -bound, bound)
    bias = jax.random.uniform(kb, (out_features,), jnp.float32, -bound, bound)
    return weight, bias


def _reference(x, weight, bias, target, noise, p, training):
    if p > 0.0 and training:
        t = jnp.zeros_like(weight) if target is None else target
        n = noise.reshape(1, -1).astype(jnp.float32)
        if p == 1.0:
            w_mixed = t
        else:
            w_mixed = ((1.0 - n) * t + n * weight - p * t) / (1.0 - p)
    else:
        w_mixed = weight
    return x @ w_mixed.T + bias[None, :]


if __name__ == "__main__":
    key = jax.random.PRNGKey(0)
    k_param, k_tgt, k_x, k_noise = jax.random.split(key, 4)

    batch = 16
    in_features = 256
    out_features = 128
    p = 0.5

    weight, bias = init_mixlinear_params(k_param, in_features, out_features)
    target = jax.random.uniform(k_tgt, (out_features, in_features), jnp.float32,
                                -0.05, 0.05)
    x = jax.random.normal(k_x, (batch, in_features), jnp.float32)
    # Bernoulli(1 - p) mask, one sample per input column, shared across rows.
    noise = jax.random.bernoulli(k_noise, 1.0 - p, (in_features,)).astype(jnp.float32)

    # Small tiles to exercise the M grid and the K-accumulator path.
    tiles = dict(tm=8, tn=128, tk=128)

    # 1) training, target=None (dropout-style mixout): x-scaling kernel.
    out1 = jax.block_until_ready(
        mix_linear(x, weight, bias, None, noise, p=p, training=True, **tiles))
    ref1 = _reference(x, weight, bias, None, noise, p, True)
    assert jnp.allclose(out1, ref1, atol=1e-4, rtol=1e-4), "mismatch (target=None)"

    # 2) training, pretrained target: weight-mix kernel.
    out2 = jax.block_until_ready(
        mix_linear(x, weight, bias, target, noise, p=p, training=True, **tiles))
    ref2 = _reference(x, weight, bias, target, noise, p, True)
    assert jnp.allclose(out2, ref2, atol=1e-4, rtol=1e-4), "mismatch (target given)"

    # 3) eval mode: plain linear kernel (no noise/target DMA).
    out3 = jax.block_until_ready(
        mix_linear(x, weight, bias, target, None, p=p, training=False, **tiles))
    ref3 = _reference(x, weight, bias, target, None, p, False)
    assert jnp.allclose(out3, ref3, atol=1e-4, rtol=1e-4), "mismatch (eval)"

    print("KERNEL_OK")
</pallas_src>

<mosaic_0001>
module attributes {stable_mosaic.version = 11 : i64} {
  func.func @_mix_x_kernel(%arg0: i32, %arg1: i32, %arg2: i32, %arg3: memref<8x128xf32, #tpu.memory_space<vmem>>, %arg4: memref<128x128xf32, #tpu.memory_space<vmem>>, %arg5: memref<1x128xf32, #tpu.memory_space<vmem>>, %arg6: memref<1x128xf32, #tpu.memory_space<vmem>>, %arg7: memref<8x128xf32, #tpu.memory_space<vmem>>, %arg8: memref<8x128xf32, #tpu.memory_space<vmem>>) attributes {dimension_semantics = [#tpu.dimension_semantics<parallel>, #tpu.dimension_semantics<parallel>, #tpu.dimension_semantics<arbitrary>], iteration_bounds = array<i64: 2, 1, 2>, scalar_prefetch = 0 : i64, scratch_operands = 1 : i64, tpu.core_type = #tpu.core_type<tc>, window_params = [{transform_indices = @transform_0, window_bounds = array<i64: 8, 128>}, {transform_indices = @transform_1, window_bounds = array<i64: 128, 128>}, {transform_indices = @transform_2, window_bounds = array<i64: 1, 128>}, {transform_indices = @transform_3, window_bounds = array<i64: 1, 128>}, {transform_indices = @transform_4, window_bounds = array<i64: 8, 128>}]} {
    %c0_i32 = arith.constant 0 : i32
    %0 = arith.cmpi eq, %arg2, %c0_i32 : i32
    %1 = arith.extui %0 : i1 to i32
    %c0_i32_0 = arith.constant 0 : i32
    %2 = arith.cmpi ne, %1, %c0_i32_0 : i32
    scf.if %2 {
      %cst_12 = arith.constant 0.000000e+00 : f32
      %17 = vector.broadcast %cst_12 : f32 to vector<8x128xf32>
      %c0_13 = arith.constant 0 : index
      %c0_14 = arith.constant 0 : index
      %18 = vector.load %arg8[%c0_13, %c0_14] : memref<8x128xf32, #tpu.memory_space<vmem>>, vector<8x128xf32>
      tpu.vector_store %arg8[%c0_13, %c0_14], %17 {strides = array<i32>} : memref<8x128xf32, #tpu.memory_space<vmem>>, vector<8x128xf32>,
    } else {
    }
    %c0 = arith.constant 0 : index
    %c0_1 = arith.constant 0 : index
    %3 = vector.load %arg5[%c0, %c0_1] : memref<1x128xf32, #tpu.memory_space<vmem>>, vector<1x128xf32>
    %cst = arith.constant 2.000000e+00 : f32
    %4 = vector.broadcast %cst : f32 to vector<1x128xf32>
    %5 = arith.mulf %3, %4 : vector<1x128xf32>
    %c0_2 = arith.constant 0 : index
    %c0_3 = arith.constant 0 : index
    %6 = vector.load %arg3[%c0_2, %c0_3] : memref<8x128xf32, #tpu.memory_space<vmem>>, vector<8x128xf32>
    %7 = vector.broadcast %5 : vector<1x128xf32> to vector<8x128xf32>
    %8 = arith.mulf %6, %7 : vector<8x128xf32>
    %c0_4 = arith.constant 0 : index
    %c0_5 = arith.constant 0 : index
    %9 = vector.load %arg8[%c0_4, %c0_5] : memref<8x128xf32, #tpu.memory_space<vmem>>, vector<8x128xf32>
    %c0_6 = arith.constant 0 : index
    %c0_7 = arith.constant 0 : index
    %10 = vector.load %arg4[%c0_6, %c0_7] : memref<128x128xf32, #tpu.memory_space<vmem>>, vector<128x128xf32>
    %cst_8 = arith.constant dense<0.000000e+00> : vector<8x128xf32>
    %11 = tpu.matmul %8, %10, %cst_8 {dimension_numbers = #tpu.dot_dimension_numbers<[1], [1], [0], [0], [0, 0, 1, 0], [], []>} : vector<8x128xf32>, vector<128x128xf32>, vector<8x128xf32> -> vector<8x128xf32>
    %12 = arith.addf %9, %11 : vector<8x128xf32>
    %c0_9 = arith.constant 0 : index
    %c0_10 = arith.constant 0 : index
    %13 = vector.load %arg8[%c0_9, %c0_10] : memref<8x128xf32, #tpu.memory_space<vmem>>, vector<8x128xf32>
    tpu.vector_store %arg8[%c0_9, %c0_10], %12 {strides = array<i32>} : memref<8x128xf32, #tpu.memory_space<vmem>>, vector<8x128xf32>,
    %c1_i32 = arith.constant 1 : i32
    %14 = arith.cmpi eq, %arg2, %c1_i32 : i32
    %15 = arith.extui %14 : i1 to i32
    %c0_i32_11 = arith.constant 0 : i32
    %16 = arith.cmpi ne, %15, %c0_i32_11 : i32
    scf.if %16 {
      %c0_12 = arith.constant 0 : index
      %c0_13 = arith.constant 0 : index
      %17 = vector.load %arg8[%c0_12, %c0_13] : memref<8x128xf32, #tpu.memory_space<vmem>>, vector<8x128xf32>
      %c0_14 = arith.constant 0 : index
      %c0_15 = arith.constant 0 : index
      %18 = vector.load %arg6[%c0_14, %c0_15] : memref<1x128xf32, #tpu.memory_space<vmem>>, vector<1x128xf32>
      %19 = vector.broadcast %18 : vector<1x128xf32> to vector<8x128xf32>
      %20 = arith.addf %17, %19 : vector<8x128xf32>
      %c0_16 = arith.constant 0 : index
      %c0_17 = arith.constant 0 : index
      %21 = vector.load %arg7[%c0_16, %c0_17] : memref<8x128xf32, #tpu.memory_space<vmem>>, vector<8x128xf32>
      tpu.vector_store %arg7[%c0_16, %c0_17], %20 {strides = array<i32>} : memref<8x128xf32, #tpu.memory_space<vmem>>, vector<8x128xf32>,
    } else {
    }
    return
  }
  func.func @transform_0(%arg0: i32, %arg1: i32, %arg2: i32) -> (i32, i32) {
    %c0_i32 = arith.constant 0 : i32
    return %arg0, %arg2 : i32, i32
  }
  func.func @transform_1(%arg0: i32, %arg1: i32, %arg2: i32) -> (i32, i32) {
    %c0_i32 = arith.constant 0 : i32
    return %arg1, %arg2 : i32, i32
  }
  func.func @transform_2(%arg0: i32, %arg1: i32, %arg2: i32) -> (i32, i32) {
    %c0_i32 = arith.constant 0 : i32
    %c0_i32_0 = arith.constant 0 : i32
    return %c0_i32, %arg2 : i32, i32
  }
  func.func @transform_3(%arg0: i32, %arg1: i32, %arg2: i32) -> (i32, i32) {
    %c0_i32 = arith.constant 0 : i32
    %c0_i32_0 = arith.constant 0 : i32
    return %c0_i32, %arg1 : i32, i32
  }
  func.func @transform_4(%arg0: i32, %arg1: i32, %arg2: i32) -> (i32, i32) {
    %c0_i32 = arith.constant 0 : i32
    return %arg0, %arg1 : i32, i32
  }
}

</mosaic_0001>

<llo_original>
// kernel: tpu_custom_call.1
$region0: #{tpu_custom_call.1}
  #allocation0 [shape = 'u32[]', space=smem, size = 0x4, offset = 0x4, fixed_abs, tag = 'smem constant byte address 0x4 - core index']
  #allocation1 [shape = 'u32[144,128]{1,0:T(1,128)}', space=vmem, size = 0x12000, scoped, tag = 'internal scratch']
  #allocation2 [shape = 'f32[8,128]{1,0:T(8,128)}', space=vmem, size = 0x1000, scoped, tag = 'scratch operand']
  %s0 = inlined_call_operand.hbm [shape: f32[16,256], index: 0, kind: input, shape index: {}]
  %s1 = inlined_call_operand.hbm [shape: f32[128,256], index: 1, kind: input, shape index: {}]
  %s2 = inlined_call_operand.vmem [shape: f32[1,256], index: 2, kind: input, shape index: {}]
  %s3 = inlined_call_operand.vmem [shape: f32[1,128], index: 3, kind: input, shape index: {}]
  %s4 = inlined_call_operand.hbm [shape: f32[16,128], index: 4, kind: output, shape index: {}]
  %s5 = sld [smem:[#allocation0]]
  $region65: #{tpu_custom_call.1} parent=0
    _
  %s7 = ssub.s32 1, %s5
  %s8 = scalar_select 0, %s7, %s5
  $region1: #{tpu_custom_call.1} parent=0
    #allocation3 [shape = 'u8[8192]{0}', space=vmem, size = 0x2000, scoped, tag = 'input window, operand 0']
    #allocation4 [shape = 's32[2]{0}', space=sflag, size = 0x8, scoped, tag = 'scoped memory for tpu_custom_call.1']
    #allocation5 [shape = 's32[2]{0}', space=sflag, size = 0x8, scoped, tag = 'scoped memory for tpu_custom_call.1']
    #allocation6 [shape = 'u8[131072]{0}', space=vmem, size = 0x20000, scoped, tag = 'input window, operand 1']
    #allocation7 [shape = 's32[2]{0}', space=sflag, size = 0x8, scoped, tag = 'scoped memory for tpu_custom_call.1']
    #allocation8 [shape = 'u8[8192]{0}', space=vmem, size = 0x2000, scoped, tag = 'output window, operand 0']
    %9 = vsyncpa [#allocation4], 0
    %s10 = scalar_lea.sflag [#allocation4], 1
    %11 = vsyncpa %s10, 0
    %12 = vsyncpa [#allocation7], 0
    %s13 = scalar_lea.sflag [#allocation7], 1
    %14 = vsyncpa %s13, 0
    %15 = vsyncpa [#allocation5], 0
    %s16 = scalar_lea.sflag [#allocation5], 1
    %17 = vsyncpa %s16, 0
    loop: start=0, step=1, limit=6
    $region2: #{tpu_custom_call.1} parent=1 // loop_pre_header
      _
    $region3: #{tpu_custom_call.1} parent=1 // loop_header
      %s19 = sphi 0, %s23
      %p20 = scmp.ge.s32.totalorder %s19, 6
      %s26 = sphi 0, %s45
      %s27 = sphi 0, %s41
      %s28 = sphi 0, %s37
      %s29 = sphi 0, %s26
      %s30 = sphi 0, %s27
      %s31 = sphi 0, %s28
      %s32 = sphi 0, %s29
      %s33 = sphi 0, %s30
      %s34 = sphi 0, %s31
      %s50 = sphi 0, %s52
      %s53 = sphi 0, %s50
      %s54 = sphi 0, %s53
      %s70 = sphi 0, %s54
      %s78 = sphi 0, %s80
      %s81 = sphi 0, %s78
      %s82 = sphi 0, %s81
      %s98 = sphi 0, %s82
      %s104 = sphi 0, %s106
      %s107 = sphi 0, %s104
      %s108 = sphi 0, %s107
      %s124 = sphi 0, %s108
      %s130 = sphi 0, %s132
      %s133 = sphi 0, %s130
      %s134 = sphi 0, %s133
      %s150 = sphi 0, %s134
      %s158 = sphi 0, %s160
      %s161 = sphi 0, %s158
      %s162 = sphi 0, %s161
      %s178 = sphi 0, %s162
    $region4: #{tpu_custom_call.1} parent=1 // loop_header_branch
      %22 = sbr.rel (%p20) target = $region8
    $region5: #{tpu_custom_call.1} parent=1 // loop_body
      %s24 = ssub.s32 %s19, 1
      %s25 = ssub.s32 %s19, 2
      %s35 = sadd.s32 1, %s28
      %p36 = scmp.ge.s32.totalorder %s35, 2
      %s37 = scalar_select %p36, 0, %s35
      %s38 = sadd.s32 1, %s27
      %s39 = scalar_select %p36, %s38, %s27
      %p40 = scmp.ge.s32.totalorder %s39, 1
      %s41 = scalar_select %p40, 0, %s39
      %s42 = sadd.s32 1, %s26
      %s43 = scalar_select %p40, %s42, %s26
      %p44 = scmp.ge.s32.totalorder %s43, 2
      %s45 = scalar_select %p44, 0, %s43
      %s46 = ssub.s32 %s26, %s45
      %s47 = ssub.s32 %s28, %s37
      %s48 = sor.u32 %s46, %s47
      %p49 = scmp.eq.s32.totalorder %s48, 0
      %s51 = sadd.s32 %s50, 1
      %s52 = scalar_select %p49, %s50, %s51
      %p55 = pneg %p49
      %p56 = scmp.eq.s32.totalorder %s19, 3
      %p57 = por %p55, %p56
      %p58 = scmp.ne.s32.totalorder %s50, %s53
      %p59 = scmp.eq.s32.totalorder %s19, 0
      %p60 = por %p58, %p59
      %p61 = scmp.ne.s32.totalorder %s50, %s53
      %p62 = scmp.eq.s32.totalorder %s24, 3
      %p63 = por %p61, %p62
      %p64 = scmp.ne.s32.totalorder %s53, %s54
      %p65 = scmp.eq.s32.totalorder %s24, 0
      %p66 = por %p64, %p65
      %p67 = scmp.ne.s32.totalorder %s53, %s54
      %p68 = scmp.eq.s32.totalorder %s25, 3
      %p69 = por %p67, %p68
      %p71 = scmp.ne.s32.totalorder %s54, %s70
      %p72 = scmp.eq.s32.totalorder %s25, 0
      %p73 = por %p71, %p72
      %s74 = ssub.s32 %s27, %s41
      %s75 = ssub.s32 %s28, %s37
      %s76 = sor.u32 %s74, %s75
      %p77 = scmp.eq.s32.totalorder %s76, 0
      %s79 = sadd.s32 %s78, 1
      %s80 = scalar_select %p77, %s78, %s79
      %p83 = pneg %p77
      %p84 = scmp.eq.s32.totalorder %s19, 3
      %p85 = por %p83, %p84
      %p86 = scmp.ne.s32.totalorder %s78, %s81
      %p87 = scmp.eq.s32.totalorder %s19, 0
      %p88 = por %p86, %p87
      %p89 = scmp.ne.s32.totalorder %s78, %s81
      %p90 = scmp.eq.s32.totalorder %s24, 3
      %p91 = por %p89, %p90
      %p92 = scmp.ne.s32.totalorder %s81, %s82
      %p93 = scmp.eq.s32.totalorder %s24, 0
      %p94 = por %p92, %p93
      %p95 = scmp.ne.s32.totalorder %s81, %s82
      %p96 = scmp.eq.s32.totalorder %s25, 3
      %p97 = por %p95, %p96
      %p99 = scmp.ne.s32.totalorder %s82, %s98
      %p100 = scmp.eq.s32.totalorder %s25, 0
      %p101 = por %p99, %p100
      %s102 = ssub.s32 %s28, %s37
      %p103 = scmp.eq.s32.totalorder %s102, 0
      %s105 = sadd.s32 %s104, 1
      %s106 = scalar_select %p103, %s104, %s105
      %p109 = pneg %p103
      %p110 = scmp.eq.s32.totalorder %s19, 3
      %p111 = por %p109, %p110
      %p112 = scmp.ne.s32.totalorder %s104, %s107
      %p113 = scmp.eq.s32.totalorder %s19, 0
      %p114 = por %p112, %p113
      %p115 = scmp.ne.s32.totalorder %s104, %s107
      %p116 = scmp.eq.s32.totalorder %s24, 3
      %p117 = por %p115, %p116
      %p118 = scmp.ne.s32.totalorder %s107, %s108
      %p119 = scmp.eq.s32.totalorder %s24, 0
      %p120 = por %p118, %p119
      %p121 = scmp.ne.s32.totalorder %s107, %s108
      %p122 = scmp.eq.s32.totalorder %s25, 3
      %p123 = por %p121, %p122
      %p125 = scmp.ne.s32.totalorder %s108, %s124
      %p126 = scmp.eq.s32.totalorder %s25, 0
      %p127 = por %p125, %p126
      %s128 = ssub.s32 %s27, %s41
      %p129 = scmp.eq.s32.totalorder %s128, 0
      %s131 = sadd.s32 %s130, 1
      %s132 = scalar_select %p129, %s130, %s131
      %p135 = pneg %p129
      %p136 = scmp.eq.s32.totalorder %s19, 3
      %p137 = por %p135, %p136
      %p138 = scmp.ne.s32.totalorder %s130, %s133
      %p139 = scmp.eq.s32.totalorder %s19, 0
      %p140 = por %p138, %p139
      %p141 = scmp.ne.s32.totalorder %s130, %s133
      %p142 = scmp.eq.s32.totalorder %s24, 3
      %p143 = por %p141, %p142
      %p144 = scmp.ne.s32.totalorder %s133, %s134
      %p145 = scmp.eq.s32.totalorder %s24, 0
      %p146 = por %p144, %p145
      %p147 = scmp.ne.s32.totalorder %s133, %s134
      %p148 = scmp.eq.s32.totalorder %s25, 3
      %p149 = por %p147, %p148
      %p151 = scmp.ne.s32.totalorder %s134, %s150
      %p152 = scmp.eq.s32.totalorder %s25, 0
      %p153 = por %p151, %p152
      %s154 = ssub.s32 %s26, %s45
      %s155 = ssub.s32 %s27, %s41
      %s156 = sor.u32 %s154, %s155
      %p157 = scmp.eq.s32.totalorder %s156, 0
      %s159 = sadd.s32 %s158, 1
      %s160 = scalar_select %p157, %s158, %s159
      %p163 = pneg %p157
      %p164 = scmp.eq.s32.totalorder %s19, 3
      %p165 = por %p163, %p164
      %p166 = scmp.ne.s32.totalorder %s158, %s161
      %p167 = scmp.eq.s32.totalorder %s19, 0
      %p168 = por %p166, %p167
      %p169 = scmp.ne.s32.totalorder %s158, %s161
      %p170 = scmp.eq.s32.totalorder %s24, 3
      %p171 = por %p169, %p170
      %p172 = scmp.ne.s32.totalorder %s161, %s162
      %p173 = scmp.eq.s32.totalorder %s24, 0
      %p174 = por %p172, %p173
      %p175 = scmp.ne.s32.totalorder %s161, %s162
      %p176 = scmp.eq.s32.totalorder %s25, 3
      %p177 = por %p175, %p176
      %p179 = scmp.ne.s32.totalorder %s162, %s178
      %p180 = scmp.eq.s32.totalorder %s25, 0
      %p181 = por %p179, %p180
      %p182 = scmp.le.s32.totalorder 1, %s19
      %p183 = scmp.lt.s32.totalorder %s19, 5
      %p184 = pnand %p182, %p183
      %p185 = pneg %p184
      // Predicated region
      $region9: #{tpu_custom_call.1} parent=5 // pred_check
        _
      $region10: #{tpu_custom_call.1} parent=5 // pred_check_branch
        %187 = sbr.rel (%p184) target = $region12
      $region11: #{tpu_custom_call.1} parent=5 // pred_region
        %s188 = ssub.s32 %s19, 1
        // Predicated region
        $region13: #{tpu_custom_call.1} parent=11 // pred_check
          %p189 = pneg %p146
        $region14: #{tpu_custom_call.1} parent=11 // pred_check_branch
          %191 = sbr.rel (%p189) target = $region16
        $region15: #{tpu_custom_call.1} parent=11 // pred_region
          %p192 = scmp.lt.s32.totalorder %s30, 0
          %s193 = scalar_select %p192, %s30, 0
          %s194 = scalar_lea.vmem %s3, %s193
        $region16: #{tpu_custom_call.1} parent=11 // pred_fallthru
          _
      $region12: #{tpu_custom_call.1} parent=5 // pred_fallthru
        _
      %p195 = scmp.lt.s32.totalorder %s19, 4
      // Predicated region
      $region17: #{tpu_custom_call.1} parent=5 // pred_check
        %p196 = pneg %p195
      $region18: #{tpu_custom_call.1} parent=5 // pred_check_branch
        %198 = sbr.rel (%p196) target = $region20
      $region19: #{tpu_custom_call.1} parent=5 // pred_region
        // Predicated region
        $region21: #{tpu_custom_call.1} parent=19 // pred_check
          %p199 = pneg %p60
        $region22: #{tpu_custom_call.1} parent=19 // pred_check_branch
          %201 = sbr.rel (%p199) target = $region24
        $region23: #{tpu_custom_call.1} parent=19 // pred_region
          %s202 = sand.u32 %s50, 1
          %s203 = scalar_lea.sflag [#allocation4], %s202
          %s204 = sand.u32 %s50, 1
          %s205 = smul.addr %s204, 8
          %s206 = scalar_lea.vmem [#allocation3], %s205
          %s208 = ssub.s32 128, 128
          %209 = vsyncadd %s203, %s208
          %s210 = smul.addr %s26, 2
          %s211 = sadd.s32 %s28, %s210
          %s212 = smul.addr %s211, 128
          %s213 = scalar_lea.hbm %s0, %s212
          %s215 = sshll.u32 %s206, 4
          %s216 = int_to_ptr.vmem [resolvable:$true] %s215
          %218 = dma.hbm_to_vmem [thread:$0]  %s213, 128, %s216, %s203
        $region24: #{tpu_custom_call.1} parent=19 // pred_fallthru
          _
        // Predicated region
        $region25: #{tpu_custom_call.1} parent=19 // pred_check
          %p219 = pneg %p88
        $region26: #{tpu_custom_call.1} parent=19 // pred_check_branch
          %221 = sbr.rel (%p219) target = $region28
        $region27: #{tpu_custom_call.1} parent=19 // pred_region
          %s222 = sand.u32 %s78, 1
          %s223 = scalar_lea.sflag [#allocation7], %s222
          %s224 = sand.u32 %s78, 1
          %s225 = smul.addr %s224, 128
          %s226 = scalar_lea.vmem [#allocation6], %s225
          %s227 = smul.u32 16, %s27
          %s229 = ssub.s32 2048, 2048
          %230 = vsyncadd %s223, %s229
          %s231 = smul.addr %s227, 2
          %s232 = sadd.s32 %s28, %s231
          %s233 = smul.addr %s232, 128
          %s234 = scalar_lea.hbm %s1, %s233
          %s235 = sshll.u32 %s226, 4
          %s236 = int_to_ptr.vmem [resolvable:$true] %s235
          %241 = dma.hbm_to_vmem [thread:$0]  %s234, 2048, %s236, %s223, 256, 128, 8
        $region28: #{tpu_custom_call.1} parent=19 // pred_fallthru
          _
        // Predicated region
        $region29: #{tpu_custom_call.1} parent=19 // pred_check
          %p242 = pneg %p114
        $region30: #{tpu_custom_call.1} parent=19 // pred_check_branch
          %244 = sbr.rel (%p242) target = $region32
        $region31: #{tpu_custom_call.1} parent=19 // pred_region
          %p245 = scmp.lt.s32.totalorder %s28, 1
          %s246 = scalar_select %p245, %s28, 1
          %s247 = scalar_lea.vmem %s2, %s246
        $region32: #{tpu_custom_call.1} parent=19 // pred_fallthru
          _
      $region20: #{tpu_custom_call.1} parent=5 // pred_fallthru
        _
      %p248 = scmp.le.s32.totalorder 1, %s19
      %p249 = scmp.lt.s32.totalorder %s19, 5
      %p250 = pnand %p248, %p249
      %p251 = pneg %p250
      // Predicated region
      $region33: #{tpu_custom_call.1} parent=5 // pred_check
        _
      $region34: #{tpu_custom_call.1} parent=5 // pred_check_branch
        %253 = sbr.rel (%p250) target = $region36
      $region35: #{tpu_custom_call.1} parent=5 // pred_region
        %s254 = ssub.s32 %s19, 1
        %s255 = sand.u32 %s53, 1
        %s256 = scalar_lea.sflag [#allocation4], %s255
        %s257 = sand.u32 %s53, 1
        %s258 = smul.addr %s257, 8
        %s259 = scalar_lea.vmem [#allocation3], %s258
        // Predicated region
        $region37: #{tpu_custom_call.1} parent=35 // pred_check
          %p260 = pneg %p66
        $region38: #{tpu_custom_call.1} parent=35 // pred_check_branch
          %262 = sbr.rel (%p260) target = $region40
        $region39: #{tpu_custom_call.1} parent=35 // pred_region
          %263 = dma.done %s256, 128
        $region40: #{tpu_custom_call.1} parent=35 // pred_fallthru
          _
        %s264 = sand.u32 %s81, 1
        %s265 = scalar_lea.sflag [#allocation7], %s264
        %s266 = sand.u32 %s81, 1
        %s267 = smul.addr %s266, 128
        %s268 = scalar_lea.vmem [#allocation6], %s267
        // Predicated region
        $region41: #{tpu_custom_call.1} parent=35 // pred_check
          %p269 = pneg %p94
        $region42: #{tpu_custom_call.1} parent=35 // pred_check_branch
          %271 = sbr.rel (%p269) target = $region44
        $region43: #{tpu_custom_call.1} parent=35 // pred_region
          %272 = dma.done %s265, 2048
        $region44: #{tpu_custom_call.1} parent=35 // pred_fallthru
          _
        %s273 = sand.u32 %s53, 1
        %s274 = scalar_lea.sflag [#allocation4], %s273
        %s275 = sand.u32 %s53, 1
        %s276 = smul.addr %s275, 8
        %s277 = scalar_lea.vmem [#allocation3], %s276
        %p278 = pneg %p66
        %p279 = pneg %p63
        %s280 = sand.u32 %s81, 1
        %s281 = scalar_lea.sflag [#allocation7], %s280
        %s282 = sand.u32 %s81, 1
        %s283 = smul.addr %s282, 128
        %s284 = scalar_lea.vmem [#allocation6], %s283
        %p285 = pneg %p94
        %p286 = pneg %p91
        %p287 = scmp.lt.s32.totalorder %s31, 1
        %s288 = scalar_select %p287, %s31, 1
        %s289 = scalar_lea.vmem %s2, %s288
        %p290 = pneg %p120
        %p291 = pneg %p117
        %p292 = scmp.lt.s32.totalorder %s30, 0
        %s293 = scalar_select %p292, %s30, 0
        %s294 = scalar_lea.vmem %s3, %s293
        %p295 = pneg %p146
        %p296 = pneg %p143
        %p297 = pneg %p174
        %p298 = pneg %p171
        %s299 = sand.u32 %s161, 1
        %s300 = scalar_lea.sflag [#allocation5], %s299
        %s301 = sand.u32 %s161, 1
        %s302 = smul.addr %s301, 8
        %s303 = scalar_lea.vmem [#allocation8], %s302
        %s304 = smul.u32 16, %s30
        %p305 = scmp.lt.s32.totalorder %s31, 1
        %s306 = scalar_select %p305, %s31, 1
        %s307 = scalar_lea.vmem %s2, %s306
        %p308 = scmp.lt.s32.totalorder %s30, 0
        %s309 = scalar_select %p308, %s30, 0
        %s310 = scalar_lea.vmem %s3, %s309
        %p311 = scmp.eq.s32.totalorder %s31, 0
        // Predicated region
        $region45: #{tpu_custom_call.1} parent=35 // pred_check
          %p312 = pneg %p311
        $region46: #{tpu_custom_call.1} parent=35 // pred_check_branch
          %314 = sbr.rel (%p312) target = $region48
        $region47: #{tpu_custom_call.1} parent=35 // pred_region
          %315 = vst [vmem:[#allocation2] sm:$0xff] 0.0
        $region48: #{tpu_custom_call.1} parent=35 // pred_fallthru
          _
        %v316 = vld [vmem:[%s307] sm:$0x1]
        %v317 = vmul.f32 %v316, 2.0
        %v318 = vld [vmem:[%s259] sm:$0xff]
        %v320 = vlaneseq
        %v321 = vshrl.u32 %v320, 7
        %v322 = vsub.s32 0, %v321
        %v323 = vrot.slane %v317, %v322
        %v325 = vmul.f32 %v318, %v323
        %v326 = vld [vmem:[#allocation2] sm:$0xff]
        %v327 = vld [vmem:[%s268] sm:$0xff]
        %v328 = vld [vmem:[%s268 + $0x8] sm:$0xff]
        %v329 = vld [vmem:[%s268 + $0x10] sm:$0xff]
        %v330 = vld [vmem:[%s268 + $0x18] sm:$0xff]
        %v331 = vld [vmem:[%s268 + $0x20] sm:$0xff]
        %v332 = vld [vmem:[%s268 + $0x28] sm:$0xff]
        %v333 = vld [vmem:[%s268 + $0x30] sm:$0xff]
        %v334 = vld [vmem:[%s268 + $0x38] sm:$0xff]
        %v335 = vld [vmem:[%s268 + $0x40] sm:$0xff]
        %v336 = vld [vmem:[%s268 + $0x48] sm:$0xff]
        %v337 = vld [vmem:[%s268 + $0x50] sm:$0xff]
        %v338 = vld [vmem:[%s268 + $0x58] sm:$0xff]
        %v339 = vld [vmem:[%s268 + $0x60] sm:$0xff]
        %v340 = vld [vmem:[%s268 + $0x68] sm:$0xff]
        %v341 = vld [vmem:[%s268 + $0x70] sm:$0xff]
        %v342 = vld [vmem:[%s268 + $0x78] sm:$0xff]
        %343 = vmatprep.subr.mxu0 0.0
        %344 = vmatpush1.xpose.msra.mxu0 %v327
        %345 = vmatprep.subr.mxu0 0.0
        %346 = vmatpush1.xpose.msra.mxu0 %v328
        %347 = vmatprep.subr.mxu0 0.0
        %348 = vmatpush1.xpose.msra.mxu0 %v329
        %349 = vmatprep.subr.mxu0 0.0
        %350 = vmatpush1.xpose.msra.mxu0 %v330
        %351 = vmatprep.subr.mxu0 0.0
        %352 = vmatpush1.xpose.msra.mxu0 %v331
        %353 = vmatprep.subr.mxu0 0.0
        %354 = vmatpush1.xpose.msra.mxu0 %v332
        %355 = vmatprep.subr.mxu0 0.0
        %356 = vmatpush1.xpose.msra.mxu0 %v333
        %357 = vmatprep.subr.mxu0 0.0
        %358 = vmatpush1.xpose.msra.mxu0 %v334
        %359 = vmatprep.subr.mxu0 0.0
        %360 = vmatpush1.xpose.msra.mxu0 %v335
        %361 = vmatprep.subr.mxu0 0.0
        %362 = vmatpush1.xpose.msra.mxu0 %v336
        %363 = vmatprep.subr.mxu0 0.0
        %364 = vmatpush1.xpose.msra.mxu0 %v337
        %365 = vmatprep.subr.mxu0 0.0
        %366 = vmatpush1.xpose.msra.mxu0 %v338
        %367 = vmatprep.subr.mxu0 0.0
        %368 = vmatpush1.xpose.msra.mxu0 %v339
        %369 = vmatprep.subr.mxu0 0.0
        %370 = vmatpush1.xpose.msra.mxu0 %v340
        %371 = vmatprep.subr.mxu0 0.0
        %372 = vmatpush1.xpose.msra.mxu0 %v341
        %373 = vmatprep.subr.mxu0 0.0
        %374 = vmatpush1.xpose.msra.mxu0 %v342
        %375 = vmatprep.subr.mxu0 0.0
        %376 = vmatpush1.xpose.msra.mxu0 0.0
        %377 = vmatprep.subr.mxu0 0.0
        %378 = vmatpush1.xpose.msra.mxu0 0.0
        %379 = vmatprep.subr.mxu0 0.0
        %380 = vmatpush1.xpose.msra.mxu0 0.0
        %381 = vmatprep.subr.mxu0 0.0
        %382 = vmatpush1.xpose.msra.mxu0 0.0
        %383 = vmatprep.subr.mxu0 0.0
        %384 = vmatpush1.xpose.msra.mxu0 0.0
        %385 = vmatprep.subr.mxu0 0.0
        %386 = vmatpush1.xpose.msra.mxu0 0.0
        %387 = vmatprep.subr.mxu0 0.0
        %388 = vmatpush1.xpose.msra.mxu0 0.0
        %389 = vmatprep.subr.mxu0 0.0
        %390 = vmatpush1.xpose.msra.mxu0 0.0
        %391 = vmatprep.subr.mxu0 0.0
        %392 = vmatpush1.xpose.msra.mxu0 0.0
        %393 = vmatprep.subr.mxu0 0.0
        %394 = vmatpush1.xpose.msra.mxu0 0.0
        %395 = vmatprep.subr.mxu0 0.0
        %396 = vmatpush1.xpose.msra.mxu0 0.0
        %397 = vmatprep.subr.mxu0 0.0
        %398 = vmatpush1.xpose.msra.mxu0 0.0
        %399 = vmatprep.subr.mxu0 0.0
        %400 = vmatpush1.xpose.msra.mxu0 0.0
        %401 = vmatprep.subr.mxu0 0.0
        %402 = vmatpush1.xpose.msra.mxu0 0.0
        %403 = vmatprep.subr.mxu0 0.0
        %404 = vmatpush1.xpose.msra.mxu0 0.0
        %405 = vmatprep.subr.mxu0 0.0
        %406 = vmatpush1.xpose.msra.mxu0 0.0
        %407 = vmatprep.mubr.f32.mxu0 0.0
        %408 = vmatmul.mubr.f32.gmra.mrb[0].mxu0 %v325
        %v409 = vpop.f32.mrb[0].mxu0
        %v410 = vadd.f32 0.0, %v409
        %v411 = vpop.f32.mrb[0].mxu0
        %412 = vdwg.mxu0
        %v413 = vadd.f32 %v326, %v410
        %414 = vst [vmem:[#allocation2] sm:$0xff] %v413
        %p415 = scmp.eq.s32.totalorder %s31, 1
        // Predicated region
        $region49: #{tpu_custom_call.1} parent=35 // pred_check
          %p416 = pneg %p415
        $region50: #{tpu_custom_call.1} parent=35 // pred_check_branch
          %418 = sbr.rel (%p416) target = $region52
        $region51: #{tpu_custom_call.1} parent=35 // pred_region
          %v419 = vld [vmem:[#allocation2] sm:$0xff]
          %v420 = vld [vmem:[%s310] sm:$0x1]
          %v422 = vlaneseq
          %v423 = vshrl.u32 %v422, 7
          %v424 = vsub.s32 0, %v423
          %v425 = vrot.slane %v420, %v424
          %v427 = vadd.f32 %v419, %v425
          %428 = vst [vmem:[%s303] sm:$0xff] %v427
        $region52: #{tpu_custom_call.1} parent=35 // pred_fallthru
          _
        %s429 = sand.u32 %s161, 1
        %s430 = scalar_lea.sflag [#allocation5], %s429
        %s431 = sand.u32 %s161, 1
        %s432 = smul.addr %s431, 8
        %s433 = scalar_lea.vmem [#allocation8], %s432
        // Predicated region
        $region53: #{tpu_custom_call.1} parent=35 // pred_check
          %p434 = pneg %p171
        $region54: #{tpu_custom_call.1} parent=35 // pred_check_branch
          %436 = sbr.rel (%p434) target = $region56
        $region55: #{tpu_custom_call.1} parent=35 // pred_region
          %s438 = ssub.s32 128, 128
          %439 = vsyncadd %s430, %s438
          %s440 = sadd.s32 %s30, %s29
          %s441 = smul.addr %s440, 128
          %s442 = scalar_lea.hbm %s4, %s441
          %s444 = sshll.u32 %s433, 4
          %s445 = int_to_ptr.vmem [resolvable:$true] %s444
          %447 = dma.vmem_to_hbm [thread:$0]  %s445, 128, %s442, %s430
        $region56: #{tpu_custom_call.1} parent=35 // pred_fallthru
          _
      $region36: #{tpu_custom_call.1} parent=5 // pred_fallthru
        _
      %p448 = scmp.le.s32.totalorder 2, %s19
      // Predicated region
      $region57: #{tpu_custom_call.1} parent=5 // pred_check
        %p449 = pneg %p448
      $region58: #{tpu_custom_call.1} parent=5 // pred_check_branch
        %451 = sbr.rel (%p449) target = $region60
      $region59: #{tpu_custom_call.1} parent=5 // pred_region
        %s452 = ssub.s32 %s19, 2
        // Predicated region
        $region61: #{tpu_custom_call.1} parent=59 // pred_check
          %p453 = pneg %p177
        $region62: #{tpu_custom_call.1} parent=59 // pred_check_branch
          %455 = sbr.rel (%p453) target = $region64
        $region63: #{tpu_custom_call.1} parent=59 // pred_region
          %s456 = sand.u32 %s162, 1
          %s457 = scalar_lea.sflag [#allocation5], %s456
          %s458 = sand.u32 %s162, 1
          %s459 = smul.addr %s458, 8
          %s460 = scalar_lea.vmem [#allocation8], %s459
          %461 = dma.done %s457, 128
        $region64: #{tpu_custom_call.1} parent=59 // pred_fallthru
          _
      $region60: #{tpu_custom_call.1} parent=5 // pred_fallthru
        _
    $region6: #{tpu_custom_call.1} parent=1 // loop_footer
      %s23 = sadd.s32 1, %s19
    $region7: #{tpu_custom_call.1} parent=1 // loop_footer_branch
      %18 = sbr.rel target = $region3
    $region8: #{tpu_custom_call.1} parent=1 // loop_exit
      _
    %462 = vsyncpa [#allocation4], 1
    %s463 = scalar_lea.sflag [#allocation4], 1
    %464 = vsyncpa %s463, 1
    %465 = vsyncpa [#allocation7], 1
    %s466 = scalar_lea.sflag [#allocation7], 1
    %467 = vsyncpa %s466, 1
    %468 = vsyncpa [#allocation5], 1
    %s469 = scalar_lea.sflag [#allocation5], 1
    %470 = vsyncpa %s469, 1

</llo_original>
